<compile_context>
chip_gen: v7x
topology: tpu7x:2x2x1
jax: 0.10.0
libtpu: 0.0.40
codegen_flags: <defaults>
</compile_context>

<pallas_src>
import jax
import jax.numpy as jnp
from jax.experimental import pallas as pl
from jax.experimental.pallas import tpu as pltpu

LANES = 128                         # vreg lane width
MAX_BLOCK_BYTES = 2 * 1024 * 1024   # ~2 MiB/block; in+out double-buffered ~= 8 MiB VMEM


def line_kernel(w_ref, b_ref, x_ref, o_ref):
    # w_ref, b_ref: (1, 1) f32 scalars in SMEM.  x_ref / o_ref: current
    # (block_rows, 128) VMEM tile in the input's native dtype.
    w = w_ref[0, 0]
    b = b_ref[0, 0]
    # Upcast in-register to f32 for the multiply-add (v5e's VPU has no bf16
    # math), store back in the on-HBM dtype -> DMA traffic stays narrow.
    y = x_ref[...].astype(jnp.float32) * w + b
    o_ref[...] = y.astype(o_ref.dtype)


def _grid_dim_semantics():
    # Only CORE_PARALLEL actually shards the grid across v7x's two TensorCores;
    # on single-TC chips (v5e/v6e) plain PARALLEL is the safe choice.
    try:
        kind = jax.devices()[0].device_kind.lower()
    except Exception:  # pragma: no cover
        kind = ""
    if "v7" in kind and hasattr(pltpu, "CORE_PARALLEL"):
        return (pltpu.CORE_PARALLEL,)
    return (pltpu.PARALLEL,)


def _line_2d(x2d, w_s, b_s):
    """Run the affine kernel over a lane-dense (rows, 128) slab."""
    rows, lanes = x2d.shape
    assert lanes == LANES
    itemsize = jnp.dtype(x2d.dtype).itemsize
    # 4096 rows (f32) / 8192 (bf16) / 16384 (i8): always a power of two that is
    # a multiple of the dtype's sublane granule.
    max_rows = MAX_BLOCK_BYTES // (LANES * itemsize)
    if rows <= max_rows:
        block_rows = rows        # single block == full array dims (exempt from /8 rule)
    else:
        block_rows = max_rows
    grid = (pl.cdiv(rows, block_rows),)  # last block may be ragged; Pallas masks it

    nbytes = rows * LANES * itemsize
    cost = pl.CostEstimate(flops=2 * rows * LANES, transcendentals=0,
                           bytes_accessed=2 * nbytes)

    return pl.pallas_call(
        line_kernel,
        out_shape=jax.ShapeDtypeStruct((rows, LANES), x2d.dtype),
        grid=grid,
        in_specs=[
            pl.BlockSpec(memory_space=pltpu.MemorySpace.SMEM),    # w scalar
            pl.BlockSpec(memory_space=pltpu.MemorySpace.SMEM),    # b scalar
            pl.BlockSpec((block_rows, LANES), lambda i: (i, 0)),  # x tile
        ],
        out_specs=pl.BlockSpec((block_rows, LANES), lambda i: (i, 0)),
        compiler_params=pltpu.CompilerParams(
            dimension_semantics=_grid_dim_semantics(),
        ),
        cost_estimate=cost,
        # No input_output_aliases: inside jit a non-donated input would force a
        # defensive copy, adding an HBM pass instead of saving an allocation.
    )(w_s, b_s, x2d)


@jax.jit
def line_network(x, w, b):
    """Forward pass of LineNetwork: nn.Linear(1, 1) applied to x of shape (..., 1)."""
    orig_shape = x.shape
    orig_dtype = x.dtype
    total = int(x.size)
    if total == 0:
        return jnp.zeros(orig_shape, orig_dtype)

    # PyTorch Linear only takes floating inputs; keep float dtypes as-is so HBM
    # traffic stays narrow, promote anything else to f32.
    compute_dtype = orig_dtype if jnp.issubdtype(orig_dtype, jnp.floating) else jnp.float32

    w_s = w.reshape(1, 1).astype(jnp.float32)
    b_s = b.reshape(1, 1).astype(jnp.float32)

    x_flat = jnp.ravel(x).astype(compute_dtype)   # no-op cast for float inputs

    if total % LANES == 0:
        # Fast path: zero-copy reshape into the lane-dense slab, no pad/slice.
        y_flat = _line_2d(x_flat.reshape(total // LANES, LANES), w_s, b_s).reshape(total)
    else:
        # Ragged size: pad only up to the next multiple of 128 (<= 127 elems).
        # TODO(synk): for huge ragged N, mask the tail in-kernel (SMEM valid
        # count) to also drop this pad/slice pair.
        pad = (-total) % LANES
        xp = jnp.pad(x_flat, (0, pad))
        y2d = _line_2d(xp.reshape((total + pad) // LANES, LANES), w_s, b_s)
        y_flat = y2d.reshape(total + pad)[:total]

    return y_flat.reshape(orig_shape).astype(orig_dtype)


if __name__ == "__main__":
    key = jax.random.PRNGKey(0)
    k_x, k_w, k_b, k_x2, k_x3 = jax.random.split(key, 5)

    # PyTorch-style Linear(1, 1) init: uniform in [-1/sqrt(fan_in), 1/sqrt(fan_in)] = [-1, 1].
    w = jax.random.uniform(k_w, (1, 1), minval=-1.0, maxval=1.0, dtype=jnp.float32)
    b = jax.random.uniform(k_b, (1,), minval=-1.0, maxval=1.0, dtype=jnp.float32)

    # Small input consistent with Linear(1, 1): batch of 8 scalar samples.
    N = 8
    x = jax.random.normal(k_x, (N, 1), dtype=jnp.float32)
    y = jax.block_until_ready(line_network(x, w, b))
    y_ref = x @ w.T + b
    assert y.shape == (N, 1)
    assert jnp.allclose(y, y_ref, atol=1e-6), (y, y_ref)

    # 128-aligned batch: exercises the zero-copy fast path, the tiled grid
    # (rows > block_rows) and a ragged last block.
    N2 = 4096 * 128 + 2 * 128   # rows = 4098 -> grid = 2, partial final block
    x2 = jax.random.normal(k_x2, (N2, 1), dtype=jnp.float32)
    y2 = jax.block_until_ready(line_network(x2, w, b))
    assert y2.shape == (N2, 1)
    assert jnp.allclose(y2, x2 @ w.T + b, atol=1e-6)

    # Ragged batch (not a multiple of 128): exercises the small-pad path.
    N3 = 70_000
    x3 = jax.random.normal(k_x3, (N3, 1), dtype=jnp.float32)
    y3 = jax.block_until_ready(line_network(x3, w, b))
    assert y3.shape == (N3, 1)
    assert jnp.allclose(y3, x3 @ w.T + b, atol=1e-6)

    # bf16 input: native-dtype DMA (half the HBM bytes), f32 in-register FMA.
    xb = x2.astype(jnp.bfloat16)
    yb = jax.block_until_ready(line_network(xb, w, b))
    yb_ref = (xb.astype(jnp.float32) @ w.T + b).astype(jnp.bfloat16)
    assert yb.dtype == jnp.bfloat16
    assert jnp.allclose(yb.astype(jnp.float32), yb_ref.astype(jnp.float32),
                        atol=5e-2, rtol=5e-2)

    print("KERNEL_OK")
</pallas_src>

<mosaic_0001>
module attributes {stable_mosaic.version = 11 : i64} {
  func.func @line_kernel(%arg0: i32, %arg1: memref<1x1xf32, #tpu.memory_space<smem>>, %arg2: memref<1x1xf32, #tpu.memory_space<smem>>, %arg3: memref<1x128xf32, #tpu.memory_space<vmem>>, %arg4: memref<1x128xf32, #tpu.memory_space<vmem>>) attributes {dimension_semantics = [#tpu.dimension_semantics<parallel>], iteration_bounds = array<i64: 1>, scalar_prefetch = 0 : i64, scratch_operands = 0 : i64, tpu.core_type = #tpu.core_type<tc>, window_params = [{transform_indices = @transform_0, window_bounds = array<i64: 1, 1>}, {transform_indices = @transform_1, window_bounds = array<i64: 1, 1>}, {transform_indices = @transform_2, window_bounds = array<i64: 1, 128>}, {transform_indices = @transform_3, window_bounds = array<i64: 1, 128>}]} {
    %c0 = arith.constant 0 : index
    %c0_0 = arith.constant 0 : index
    %0 = memref.load %arg1[%c0, %c0_0] : memref<1x1xf32, #tpu.memory_space<smem>>
    %c0_1 = arith.constant 0 : index
    %c0_2 = arith.constant 0 : index
    %1 = memref.load %arg2[%c0_1, %c0_2] : memref<1x1xf32, #tpu.memory_space<smem>>
    %c0_3 = arith.constant 0 : index
    %c0_4 = arith.constant 0 : index
    %2 = vector.load %arg3[%c0_3, %c0_4] : memref<1x128xf32, #tpu.memory_space<vmem>>, vector<1x128xf32>
    %3 = vector.broadcast %0 : f32 to vector<1x128xf32>
    %4 = arith.mulf %2, %3 : vector<1x128xf32>
    %5 = vector.broadcast %1 : f32 to vector<1x128xf32>
    %6 = arith.addf %4, %5 : vector<1x128xf32>
    %c0_5 = arith.constant 0 : index
    %c0_6 = arith.constant 0 : index
    %7 = vector.load %arg4[%c0_5, %c0_6] : memref<1x128xf32, #tpu.memory_space<vmem>>, vector<1x128xf32>
    tpu.vector_store %arg4[%c0_5, %c0_6], %6 {strides = array<i32>} : memref<1x128xf32, #tpu.memory_space<vmem>>, vector<1x128xf32>,
    return
  }
  func.func @transform_0(%arg0: i32) -> (i32, i32) {
    %c0_i32 = arith.constant 0 : i32
    %c0_i32_0 = arith.constant 0 : i32
    %c0_i32_1 = arith.constant 0 : i32
    return %c0_i32, %c0_i32_0 : i32, i32
  }
  func.func @transform_1(%arg0: i32) -> (i32, i32) {
    %c0_i32 = arith.constant 0 : i32
    %c0_i32_0 = arith.constant 0 : i32
    %c0_i32_1 = arith.constant 0 : i32
    return %c0_i32, %c0_i32_0 : i32, i32
  }
  func.func @transform_2(%arg0: i32) -> (i32, i32) {
    %c0_i32 = arith.constant 0 : i32
    %c0_i32_0 = arith.constant 0 : i32
    return %arg0, %c0_i32 : i32, i32
  }
  func.func @transform_3(%arg0: i32) -> (i32, i32) {
    %c0_i32 = arith.constant 0 : i32
    %c0_i32_0 = arith.constant 0 : i32
    return %arg0, %c0_i32 : i32, i32
  }
}

</mosaic_0001>

<llo_original>
// kernel: line_network.1
$region0: #{line_network.1}
  #allocation0 [shape = 'u32[]', space=smem, size = 0x4, offset = 0x4, fixed_abs, tag = 'smem constant byte address 0x4 - core index']
  #allocation1 [shape = 'u32[144,128]{1,0:T(1,128)}', space=vmem, size = 0x12000, scoped, tag = 'internal scratch']
  #allocation2 [shape = 'f32[1,1]{1,0:T(1,128)S(6)}', space=smem, size = 0x200, scoped, tag = 'scoped memory for line_network.1']
  #allocation3 [shape = 'f32[1,1]{1,0:T(1,128)S(6)}', space=smem, size = 0x200, scoped, tag = 'scoped memory for line_network.1']
  %s0 = inlined_call_operand.<no memory space> [shape: f32[1,1], index: 0, kind: input, shape index: {}]
  %s1 = inlined_call_operand.<no memory space> [shape: f32[1,1], index: 1, kind: input, shape index: {}]
  %s2 = inlined_call_operand.vmem [shape: f32[1,128], index: 2, kind: input, shape index: {}]
  %s3 = inlined_call_operand.vmem [shape: f32[1,128], index: 3, kind: output, shape index: {}]
  %s4 = sld [smem:[#allocation0]]
  $region22: #{line_network.1} parent=0
    _
  %s6 = ssub.s32 1, %s4
  %s7 = scalar_select 0, %s6, %s4
  %8 = sst [smem:[#allocation2]] %s0
  %9 = sst [smem:[#allocation3]] %s1
  // Predicated region
  $region2: #{line_network.1} parent=0 // pred_check
    _
  $region3: #{line_network.1} parent=0 // pred_check_branch
    %11 = sbr.rel (0) target = $region5
  $region4: #{line_network.1} parent=0 // pred_region
    _
  $region5: #{line_network.1} parent=0 // pred_fallthru
    _
  // Predicated region
  $region6: #{line_network.1} parent=0 // pred_check
    _
  $region7: #{line_network.1} parent=0 // pred_check_branch
    %13 = sbr.rel (0) target = $region9
  $region8: #{line_network.1} parent=0 // pred_region
    _
  $region9: #{line_network.1} parent=0 // pred_fallthru
    _
  // Predicated region
  $region10: #{line_network.1} parent=0 // pred_check
    _
  $region11: #{line_network.1} parent=0 // pred_check_branch
    %15 = sbr.rel (0) target = $region13
  $region12: #{line_network.1} parent=0 // pred_region
    _
  $region13: #{line_network.1} parent=0 // pred_fallthru
    _
  %s16 = sld [smem:[#allocation2]]
  %s17 = sld [smem:[#allocation3]]
  %v18 = vld [vmem:[%s2] sm:$0x1]
  %v19 = vstv %s16
  %v20 = vmul.f32 %v18, %v19
  %v21 = vstv %s17
  %v22 = vadd.f32 %v20, %v21
  %23 = vst [vmem:[%s3] sm:$0x1] %v22
  // Predicated region
  $region14: #{line_network.1} parent=0 // pred_check
    _
  $region15: #{line_network.1} parent=0 // pred_check_branch
    %25 = sbr.rel (0) target = $region17
  $region16: #{line_network.1} parent=0 // pred_region
    _
  $region17: #{line_network.1} parent=0 // pred_fallthru
    _
  // Predicated region
  $region18: #{line_network.1} parent=0 // pred_check
    _
  $region19: #{line_network.1} parent=0 // pred_check_branch
    %27 = sbr.rel (0) target = $region21
  $region20: #{line_network.1} parent=0 // pred_region
    _
  $region21: #{line_network.1} parent=0 // pred_fallthru
    _

</llo_original>
